<compile_context>
chip_gen: v6e
topology: v6e:2x2x1
jax: 0.10.0
libtpu: 0.0.40
codegen_flags: <defaults>
</compile_context>

<pallas_src>
import functools
import math

import numpy as np
import jax
import jax.numpy as jnp
from jax import lax
from jax.experimental import pallas as pl
from jax.experimental.pallas import tpu as pltpu


def _as_i32(v):
    """Wrap an unsigned 32-bit constant into a Python int with int32 value."""
    v &= 0xFFFFFFFF
    return v - (1 << 32) if v >= (1 << 31) else v


_MASK24 = 0x00FFFFFF
_INV_2_24 = 1.0 / float(1 << 24)
_TWO_PI = 2.0 * math.pi

_GOLD = _as_i32(0x9E3779B1)        # odd (golden-ratio) multiplier
_M1 = _as_i32(0x85EBCA6B)          # murmur3 fmix32 constants
_M2 = _as_i32(0xC2B2AE35)
_SALT_DROP2D = _as_i32(0x1B873593)  # disjoint seed spaces per path
_SALT_ELEM = _as_i32(0x27D4EB2F)
_SALT_GAUSS = _as_i32(0x165667B1)

_VMEM_LIMIT_BYTES = 40 * 1024 * 1024     # > v5e's 16 MiB scoped default, < v7x's 64 MiB physical
_BERNOULLI_TILE_BYTES = 4 * 1024 * 1024  # per-buffer tile budget (in+out double-buffered = 16 MiB)
_GAUSSIAN_TILE_BYTES = 2 * 1024 * 1024   # Box-Muller f32 temporaries are tile-sized -> keep headroom


def _threshold24(p):
    """Integer drop-threshold: drop element iff (hash & 0xFFFFFF) < p * 2^24."""
    return int(min(max(round(float(p) * float(1 << 24)), 0), 1 << 24))


# ---------------------------------------------------------------------------
# Counter-based RNG (pure int32 VPU work; portable, tiling-independent)
# ---------------------------------------------------------------------------

def _fmix32(h):
    """murmur3 finalizer on int32 (logical shift emulated by mask-after-ashr)."""
    h = h ^ ((h >> 16) & 0xFFFF)
    h = h * _M1
    h = h ^ ((h >> 13) & 0x7FFFF)
    h = h * _M2
    h = h ^ ((h >> 16) & 0xFFFF)
    return h


def _hash_tile(shape, full_tile_rows, salt):
    """Hash of the global element index for a (rows, cols) sub-tile of the
    current grid block.  `full_tile_rows` is the block's full row extent."""
    rows, cols = shape
    row0 = pl.program_id(0) * full_tile_rows
    col0 = pl.program_id(1) * cols
    ncols = pl.num_programs(1) * cols
    gr = lax.broadcasted_iota(jnp.int32, shape, 0) + row0
    gc = lax.broadcasted_iota(jnp.int32, shape, 1) + col0
    # TODO(synk): global index wraps mod 2^32 for tensors with > 2^31 elements.
    idx = gr * ncols + gc
    return _fmix32(idx * _GOLD + salt)


# ---------------------------------------------------------------------------
# Kernels: each operates on one (TR, TC) tile of a lane-dense 2-D view.
# ---------------------------------------------------------------------------

def _bernoulli2d_kernel(seed_ref, x_ref, o_ref, *, threshold, scale):
    """F.dropout2d: one Bernoulli draw per row (= one (n, c) channel).

    The keep decision hashes only the GLOBAL ROW index, so every column tile of
    a channel reproduces the identical decision with no reseeding."""
    tr = x_ref.shape[0]
    row0 = pl.program_id(0) * tr
    rid = lax.broadcasted_iota(jnp.int32, (tr, 1), 0) + row0
    salt = seed_ref[0] * _GOLD + _SALT_DROP2D
    h = _fmix32(rid * _GOLD + salt)
    keep = (h & _MASK24) >= threshold
    mult = keep.astype(x_ref.dtype) * scale          # (tr, 1): keep*scale, no select
    o_ref[...] = x_ref[...] * mult


def _bernoulli_elem_kernel(seed_ref, x_ref, o_ref, *, threshold, scale):
    """F.dropout: independent per-element Bernoulli (counter-based hash)."""
    tr, tc = x_ref.shape
    salt = seed_ref[0] * _GOLD + _SALT_ELEM
    h = _hash_tile((tr, tc), tr, salt)
    keep = (h & _MASK24) >= threshold
    # Build the multiplier in the input dtype (native bf16 multiply on v6e/v7x).
    o_ref[...] = x_ref[...] * (keep.astype(x_ref.dtype) * scale)


def _gaussian_kernel(seed_ref, x_ref, o_ref, *, mu, sigma):
    """soft_mask ~ clamp(N(mu, sigma), 0, 1); out = (1/mu) * soft_mask * x."""
    tr, tc = x_ref.shape
    inv_mu = 1.0 / mu
    salt = seed_ref[0] * _GOLD + _SALT_GAUSS

    def normals(shape):
        h1 = _hash_tile(shape, tr, salt)
        h2 = _fmix32(h1 ^ _M2)                                        # 2nd stream
        u1 = ((h1 & _MASK24).astype(jnp.float32) + 1.0) * _INV_2_24   # (0, 1] -> log-safe
        u2 = (h2 & _MASK24).astype(jnp.float32) * _INV_2_24           # [0, 1)
        r = jnp.sqrt(-2.0 * jnp.log(u1))
        th = _TWO_PI * u2
        return r * jnp.cos(th), r * jnp.sin(th)

    def soft_mask(z):
        return (jnp.clip(mu + sigma * z, 0.0, 1.0) * inv_mu).astype(x_ref.dtype)

    # TODO(synk): on v6e/v7x a bf16 Box-Muller chain would cut EUP work further;
    # kept f32 here because v5e has no bf16 EUP/VPU.
    if tr % 16 == 0:
        # Use BOTH Box-Muller outputs: halves the hash and log/sqrt/cos/sin work.
        half = tr // 2
        z1, z2 = normals((half, tc))
        o_ref[0:half, :] = x_ref[0:half, :] * soft_mask(z1)
        o_ref[half:tr, :] = x_ref[half:tr, :] * soft_mask(z2)
    else:
        z1, _ = normals((tr, tc))
        o_ref[...] = x_ref[...] * soft_mask(z1)


# ---------------------------------------------------------------------------
# Launcher: lane-dense padded 2-D view, tiled grid, scalar-prefetched seed.
# ---------------------------------------------------------------------------

def _round_up(v, m):
    return ((v + m - 1) // m) * m


def _plan_tiles(rows0, cols0, budget_bytes):
    """Pick lane-dense tiles and padded dims.

    - cols padded to a multiple of 128 (full-lane vst, never vst.msk);
    - tc = widest of 512/256/128 dividing the padded width;
    - tr sized so one tile stays under `budget_bytes` (counted at 4 B/elem since
      the int32 hash temporaries dominate), but capped near ceil(rows/2) so the
      grid keeps >=2 row blocks when there is data for it (both v7x TCs busy).
    """
    cols = _round_up(max(cols0, 1), 128)
    if cols % 512 == 0:
        tc = 512
    elif cols % 256 == 0:
        tc = 256
    else:
        tc = 128
    tr_budget = max(8, (budget_bytes // (tc * 4)) // 8 * 8)
    tr_split = max(8, _round_up(-(-rows0 // 2), 8))
    tr = min(tr_budget, tr_split)
    if tr >= 16:
        tr -= tr % 16        # keeps the two-output Box-Muller split sublane-aligned
    # Prefer a row tile that divides rows0 exactly (avoids a pad copy of the
    # whole tensor); otherwise pad the tail rows and slice them off afterwards.
    if rows0 >= 16 and rows0 % 8 == 0 and rows0 % tr != 0:
        step = 16 if tr >= 16 else 8
        for cand in range(tr - tr % step, max(step, tr // 4) - 1, -step):
            if cand >= 8 and rows0 % cand == 0:
                tr = cand
                break
    rows = _round_up(max(rows0, 1), tr)
    return rows, cols, tr, tc


def _run_tiled(kernel_fn, seed, x2d, tr, tc, *, transcendentals_per_elem=0):
    R, C = x2d.shape
    grid = (R // tr, C // tc)
    seed_arr = jnp.asarray([seed], dtype=jnp.int32)
    nbytes = x2d.size * x2d.dtype.itemsize
    cost = pl.CostEstimate(
        flops=2 * x2d.size,
        transcendentals=int(transcendentals_per_elem * x2d.size),
        bytes_accessed=2 * nbytes,
    )
    return pl.pallas_call(
        kernel_fn,
        out_shape=jax.ShapeDtypeStruct(x2d.shape, x2d.dtype),
        grid_spec=pltpu.PrefetchScalarGridSpec(
            num_scalar_prefetch=1,                     # seed lives in SMEM
            grid=grid,
            in_specs=[pl.BlockSpec((tr, tc), lambda i, j, seed_ref: (i, j))],
            out_specs=pl.BlockSpec((tr, tc), lambda i, j, seed_ref: (i, j)),
        ),
        compiler_params=pltpu.CompilerParams(
            dimension_semantics=("parallel", "parallel"),   # megacore sharding (v7x)
            vmem_limit_bytes=_VMEM_LIMIT_BYTES,
        ),
        cost_estimate=cost,
    )(seed_arr, x2d)


def _apply_2d(kernel_fn, seed, x2d_unpadded, budget, **run_kw):
    """Run on an explicit 2-D view, padding rows/cols to the tile grid."""
    rows0, cols0 = x2d_unpadded.shape
    rows, cols, tr, tc = _plan_tiles(rows0, cols0, budget)
    x2d = x2d_unpadded
    padded = (rows, cols) != (rows0, cols0)
    if padded:
        x2d = jnp.pad(x2d, ((0, rows - rows0), (0, cols - cols0)))
    out = _run_tiled(kernel_fn, seed, x2d, tr, tc, **run_kw)
    if padded:
        out = out[:rows0, :cols0]
    return out


def _apply_flat(kernel_fn, seed, x, budget, **run_kw):
    """Flatten to a lane-dense (rows, width) view (width a multiple of 128)."""
    orig_shape = x.shape
    flat = x.reshape(-1)
    total = flat.size
    width = 128
    for cand in (512, 256, 128):
        if total % cand == 0 and total // cand >= 8:
            width = cand
            break
    rows0 = -(-total // width)
    rows, cols, tr, tc = _plan_tiles(rows0, width, budget)
    padded_len = rows * cols
    if padded_len != total:
        flat = jnp.pad(flat, (0, padded_len - total))
    out2d = _run_tiled(kernel_fn, seed, flat.reshape(rows, cols), tr, tc, **run_kw)
    out = out2d.reshape(-1)
    if padded_len != total:
        out = out[:total]
    return out.reshape(orig_shape)


class Dropout:
    """JAX/Pallas mirror of the PyTorch Dropout module (forward only)."""

    DISTRIBUTIONS = ["bernoulli", "gaussian", "none"]

    def __init__(self, p=0.5, mu=0.5, sigma=0.3, dist="bernoulli", linear=False):
        self.dist = dist
        assert self.dist in Dropout.DISTRIBUTIONS
        self.p = float(p)
        assert 0.0 <= self.p <= 1.0
        self.mu = float(mu)
        self.sigma = float(sigma)
        assert self.sigma > 0.0
        self.linear = linear
        self.training = True

    def __call__(self, x, seed=0):
        if not self.training or self.dist == "none":
            return x

        if self.dist == "bernoulli" and not self.linear:
            # F.dropout2d semantics: one Bernoulli draw per (n, c) channel.
            if self.p == 0.0:
                return x
            if self.p >= 1.0:
                return jnp.zeros_like(x)
            assert x.ndim == 4, "dropout2d path expects NCHW input"
            N, C, H, Wsp = x.shape
            kern = functools.partial(
                _bernoulli2d_kernel,
                threshold=_threshold24(self.p),
                scale=1.0 / (1.0 - self.p),
            )
            out2d = _apply_2d(kern, seed, x.reshape(N * C, H * Wsp),
                              _BERNOULLI_TILE_BYTES)
            return out2d.reshape(x.shape)

        if self.dist == "bernoulli" and self.linear:
            # F.dropout semantics: independent per-element Bernoulli.
            if self.p == 0.0:
                return x
            if self.p >= 1.0:
                return jnp.zeros_like(x)
            kern = functools.partial(
                _bernoulli_elem_kernel,
                threshold=_threshold24(self.p),
                scale=1.0 / (1.0 - self.p),
            )
            return _apply_flat(kern, seed, x, _BERNOULLI_TILE_BYTES)

        # gaussian soft-mask dropout
        kern = functools.partial(_gaussian_kernel, mu=self.mu, sigma=self.sigma)
        return _apply_flat(kern, seed, x, _GAUSSIAN_TILE_BYTES,
                           transcendentals_per_elem=2)


if __name__ == "__main__":
    key = jax.random.PRNGKey(0)
    k1, k2, k3 = jax.random.split(key, 3)
    x = jax.random.normal(k1, (2, 4, 16, 16), dtype=jnp.float32)    # NCHW
    xa = jax.random.normal(k2, (2, 3, 7, 7), dtype=jnp.float32)     # awkward (non-128) shape
    xs = jax.random.normal(k3, (4, 8, 32, 32), dtype=jnp.float32)   # multi-tile grid

    def as_np(a):
        return np.asarray(jax.device_get(a))

    # --- bernoulli, channel-wise (F.dropout2d semantics) ---
    drop2d = Dropout(p=0.5, dist="bernoulli", linear=False)
    for inp, seed in ((x, 123), (xa, 7), (xs, 5)):
        y = jax.block_until_ready(drop2d(inp, seed=seed))
        assert y.shape == inp.shape and y.dtype == inp.dtype
        y_np, x_np = as_np(y), as_np(inp)
        for n in range(inp.shape[0]):
            for c in range(inp.shape[1]):
                ch, xc = y_np[n, c], x_np[n, c]
                assert np.allclose(ch, 0.0) or np.allclose(ch, 2.0 * xc, atol=1e-5)

    # --- bernoulli, elementwise (F.dropout semantics) ---
    drop_lin = Dropout(p=0.5, dist="bernoulli", linear=True)
    ys = jax.block_until_ready(drop_lin(xs, seed=456))
    assert ys.shape == xs.shape and ys.dtype == xs.dtype
    ys_np, xs_np = as_np(ys), as_np(xs)
    kept = ys_np != 0.0
    assert np.allclose(ys_np[kept], 2.0 * xs_np[kept], atol=1e-5)
    frac_kept = float(kept.mean())
    assert 0.35 < frac_kept < 0.65, frac_kept
    ya = jax.block_until_ready(drop_lin(xa, seed=11))   # exercises pad/slice path
    assert ya.shape == xa.shape

    # --- gaussian soft-mask dropout ---
    drop_g = Dropout(p=0.5, mu=0.5, sigma=0.3, dist="gaussian")
    yg = jax.block_until_ready(drop_g(xs, seed=789))
    yg_np = as_np(yg)
    assert yg.shape == xs.shape and np.all(np.isfinite(yg_np))
    nz = np.abs(xs_np) > 1e-6
    ratio = yg_np[nz] / xs_np[nz]
    assert ratio.min() > -1e-4 and ratio.max() < 2.0 + 1e-3   # mask in [0, 1/mu]

    # --- eval mode / 'none' dist -> identity ---
    drop2d.training = False
    assert bool(jnp.all(jax.block_until_ready(drop2d(x)) == x))
    assert bool(jnp.all(Dropout(dist="none")(x) == x))

    print("KERNEL_OK")
</pallas_src>

<mosaic_0001>
module attributes {stable_mosaic.version = 11 : i64} {
  func.func @_bernoulli2d_kernel(%arg0: i32, %arg1: i32, %arg2: memref<1xi32, #tpu.memory_space<smem>>, %arg3: memref<8x256xf32, #tpu.memory_space<vmem>>, %arg4: memref<8x256xf32, #tpu.memory_space<vmem>>) attributes {dimension_semantics = [#tpu.dimension_semantics<parallel>, #tpu.dimension_semantics<parallel>], iteration_bounds = array<i64: 1, 1>, scalar_prefetch = 1 : i64, scratch_operands = 0 : i64, tpu.core_type = #tpu.core_type<tc>, window_params = [{transform_indices = @transform_0, window_bounds = array<i64: 8, 256>}, {transform_indices = @transform_1, window_bounds = array<i64: 8, 256>}]} {
    %c8_i32 = arith.constant 8 : i32
    %0 = arith.muli %arg0, %c8_i32 : i32
    %1 = tpu.iota {dimensions = array<i32: 0>} : vector<8x1xi32>
    %2 = vector.broadcast %0 : i32 to vector<8x1xi32>
    %3 = arith.addi %1, %2 : vector<8x1xi32>
    %c0 = arith.constant 0 : index
    %4 = memref.load %arg2[%c0] : memref<1xi32, #tpu.memory_space<smem>>
    %c-1640531535_i32 = arith.constant -1640531535 : i32
    %5 = arith.muli %4, %c-1640531535_i32 : i32
    %c461845907_i32 = arith.constant 461845907 : i32
    %6 = arith.addi %5, %c461845907_i32 : i32
    %c-1640531535_i32_0 = arith.constant -1640531535 : i32
    %7 = vector.broadcast %c-1640531535_i32_0 : i32 to vector<8x1xi32>
    %8 = arith.muli %3, %7 : vector<8x1xi32>
    %9 = vector.broadcast %6 : i32 to vector<8x1xi32>
    %10 = arith.addi %8, %9 : vector<8x1xi32>
    %c16_i32 = arith.constant 16 : i32
    %11 = vector.broadcast %c16_i32 : i32 to vector<8x1xi32>
    %12 = arith.shrsi %10, %11 : vector<8x1xi32>
    %c65535_i32 = arith.constant 65535 : i32
    %13 = vector.broadcast %c65535_i32 : i32 to vector<8x1xi32>
    %14 = arith.andi %12, %13 : vector<8x1xi32>
    %15 = arith.xori %10, %14 : vector<8x1xi32>
    %c-2048144789_i32 = arith.constant -2048144789 : i32
    %16 = vector.broadcast %c-2048144789_i32 : i32 to vector<8x1xi32>
    %17 = arith.muli %15, %16 : vector<8x1xi32>
    %c13_i32 = arith.constant 13 : i32
    %18 = vector.broadcast %c13_i32 : i32 to vector<8x1xi32>
    %19 = arith.shrsi %17, %18 : vector<8x1xi32>
    %c524287_i32 = arith.constant 524287 : i32
    %20 = vector.broadcast %c524287_i32 : i32 to vector<8x1xi32>
    %21 = arith.andi %19, %20 : vector<8x1xi32>
    %22 = arith.xori %17, %21 : vector<8x1xi32>
    %c-1028477387_i32 = arith.constant -1028477387 : i32
    %23 = vector.broadcast %c-1028477387_i32 : i32 to vector<8x1xi32>
    %24 = arith.muli %22, %23 : vector<8x1xi32>
    %c16_i32_1 = arith.constant 16 : i32
    %25 = vector.broadcast %c16_i32_1 : i32 to vector<8x1xi32>
    %26 = arith.shrsi %24, %25 : vector<8x1xi32>
    %c65535_i32_2 = arith.constant 65535 : i32
    %27 = vector.broadcast %c65535_i32_2 : i32 to vector<8x1xi32>
    %28 = arith.andi %26, %27 : vector<8x1xi32>
    %29 = arith.xori %24, %28 : vector<8x1xi32>
    %c16777215_i32 = arith.constant 16777215 : i32
    %30 = vector.broadcast %c16777215_i32 : i32 to vector<8x1xi32>
    %31 = arith.andi %29, %30 : vector<8x1xi32>
    %c8388608_i32 = arith.constant 8388608 : i32
    %32 = vector.broadcast %c8388608_i32 : i32 to vector<8x1xi32>
    %33 = arith.cmpi sge, %31, %32 : vector<8x1xi32>
    %34 = arith.extui %33 : vector<8x1xi1> to vector<8x1xi32>
    %35 = arith.sitofp %34 : vector<8x1xi32> to vector<8x1xf32>
    %cst = arith.constant 2.000000e+00 : f32
    %36 = vector.broadcast %cst : f32 to vector<8x1xf32>
    %37 = arith.mulf %35, %36 : vector<8x1xf32>
    %c0_3 = arith.constant 0 : index
    %c0_4 = arith.constant 0 : index
    %38 = vector.load %arg3[%c0_3, %c0_4] : memref<8x256xf32, #tpu.memory_space<vmem>>, vector<8x256xf32>
    %39 = vector.broadcast %37 : vector<8x1xf32> to vector<8x256xf32>
    %40 = arith.mulf %38, %39 : vector<8x256xf32>
    %c0_5 = arith.constant 0 : index
    %c0_6 = arith.constant 0 : index
    %41 = vector.load %arg4[%c0_5, %c0_6] : memref<8x256xf32, #tpu.memory_space<vmem>>, vector<8x256xf32>
    tpu.vector_store %arg4[%c0_5, %c0_6], %40 {strides = array<i32>} : memref<8x256xf32, #tpu.memory_space<vmem>>, vector<8x256xf32>,
    return
  }
  func.func @transform_0(%arg0: i32, %arg1: i32, %arg2: memref<1xi32, #tpu.memory_space<smem>>) -> (i32, i32) {
    %c0_i32 = arith.constant 0 : i32
    return %arg0, %arg1 : i32, i32
  }
  func.func @transform_1(%arg0: i32, %arg1: i32, %arg2: memref<1xi32, #tpu.memory_space<smem>>) -> (i32, i32) {
    %c0_i32 = arith.constant 0 : i32
    return %arg0, %arg1 : i32, i32
  }
}

</mosaic_0001>

<llo_original>
// kernel: tpu_custom_call.1
$region0: #{tpu_custom_call.1}
  #allocation0 [shape = 'u32[]', space=smem, size = 0x4, offset = 0x4, fixed_abs, tag = 'smem constant byte address 0x4 - core index']
  #allocation1 [shape = 'u32[144,128]{1,0:T(1,128)}', space=vmem, size = 0x12000, scoped, tag = 'internal scratch']
  #allocation2 [shape = 's32[1]{0}', space=sflag, size = 0x4, scoped, tag = 'scoped memory for tpu_custom_call.1']
  #allocation3 [shape = 's32[1]{0:T(128)S(6)}', space=smem, size = 0x200, scoped, tag = 'prefetched SMEM operand 0']
  %s0 = inlined_call_operand.<no memory space> [shape: s32[1], index: 0, kind: input, shape index: {}]
  %s1 = inlined_call_operand.hbm [shape: f32[8,256], index: 1, kind: input, shape index: {}]
  %s2 = inlined_call_operand.hbm [shape: f32[8,256], index: 2, kind: output, shape index: {}]
  %s3 = sld [smem:[#allocation0]]
  $region18: #{tpu_custom_call.1} parent=0
    _
  %s5 = ssub.s32 1, %s3
  %s6 = scalar_select 0, %s5, %s3
  %7 = sst [smem:[#allocation3]] %s0
  $region1: #{tpu_custom_call.1} parent=0
    #allocation4 [shape = 'u8[8192]{0}', space=vmem, size = 0x2000, scoped, tag = 'input window, operand 1, single buffered']
    #allocation5 [shape = 's32[1]{0}', space=sflag, size = 0x4, scoped, tag = 'scoped memory for tpu_custom_call.1']
    #allocation6 [shape = 's32[1]{0}', space=sflag, size = 0x4, scoped, tag = 'scoped memory for tpu_custom_call.1']
    #allocation7 [shape = 'u8[8192]{0}', space=vmem, size = 0x2000, scoped, tag = 'output window, operand 0, single buffered']
    %8 = vsyncpa [#allocation5], 0
    %9 = vsyncpa [#allocation6], 0
    // Predicated region
    $region2: #{tpu_custom_call.1} parent=1 // pred_check
      _
    $region3: #{tpu_custom_call.1} parent=1 // pred_check_branch
      %11 = sbr.rel (0) target = $region5
    $region4: #{tpu_custom_call.1} parent=1 // pred_region
      %s13 = ssub.s32 256, 256
      %14 = vsyncadd [#allocation5], %s13
      %s16 = sshll.u32 [#allocation4], 4
      %s17 = int_to_ptr.vmem [resolvable:$true] %s16
      %19 = dma.hbm_to_vmem [thread:$0]  %s1, 256, %s17, [#allocation5]
    $region5: #{tpu_custom_call.1} parent=1 // pred_fallthru
      _
    // Predicated region
    $region6: #{tpu_custom_call.1} parent=1 // pred_check
      _
    $region7: #{tpu_custom_call.1} parent=1 // pred_check_branch
      %21 = sbr.rel (0) target = $region9
    $region8: #{tpu_custom_call.1} parent=1 // pred_region
      %22 = dma.done [#allocation5], 256
    $region9: #{tpu_custom_call.1} parent=1 // pred_fallthru
      _
    %s23 = smul.u32 0, 8
    %v24 = vlaneseq
    %v25 = vshrl.u32 %v24, 7
    %v26 = vstv %s23
    %v27 = vadd.s32 %v25, %v26
    %s28 = sld [smem:[#allocation3]]
    %s29 = smul.u32 %s28, 2654435761
    %s30 = sadd.s32 %s29, 461845907
    %v31 = vmul.u32 %v27, 2654435761
    %v32 = vstv %s30
    %v33 = vadd.s32 %v31, %v32
    %v34 = vshra.s32 %v33, 16
    %v35 = vand.u32 %v34, 65535
    %v36 = vxor.u32 %v33, %v35
    %v37 = vmul.u32 %v36, 2246822507
    %v38 = vshra.s32 %v37, 13
    %v39 = vand.u32 %v38, 524287
    %v40 = vxor.u32 %v37, %v39
    %v41 = vmul.u32 %v40, 3266489909
    %v42 = vshra.s32 %v41, 16
    %v43 = vand.u32 %v42, 65535
    %v44 = vxor.u32 %v41, %v43
    %v45 = vand.u32 %v44, 16777215
    %vm46 = vcmp.ge.s32.totalorder %v45, 8388608
    %v47 = vsel %vm46, 1, 0
    %v48 = vcvt.s32.f32 %v47
    %v49 = vmul.f32 %v48, 2.0
    %v50 = vld [vmem:[#allocation4] sm:$0xff]
    %v51 = vld [vmem:[#allocation4 + $0x8] sm:$0xff]
    %v52 = vmul.f32 %v50, %v49
    %v53 = vmul.f32 %v51, %v49
    %54 = vst [vmem:[#allocation7] sm:$0xff] %v52
    %55 = vst [vmem:[#allocation7 + $0x8] sm:$0xff] %v53
    // Predicated region
    $region10: #{tpu_custom_call.1} parent=1 // pred_check
      _
    $region11: #{tpu_custom_call.1} parent=1 // pred_check_branch
      %57 = sbr.rel (0) target = $region13
    $region12: #{tpu_custom_call.1} parent=1 // pred_region
      %s59 = ssub.s32 256, 256
      %60 = vsyncadd [#allocation6], %s59
      %s62 = sshll.u32 [#allocation7], 4
      %s63 = int_to_ptr.vmem [resolvable:$true] %s62
      %65 = dma.vmem_to_hbm [thread:$0]  %s63, 256, %s2, [#allocation6]
    $region13: #{tpu_custom_call.1} parent=1 // pred_fallthru
      _
    // Predicated region
    $region14: #{tpu_custom_call.1} parent=1 // pred_check
      _
    $region15: #{tpu_custom_call.1} parent=1 // pred_check_branch
      %67 = sbr.rel (0) target = $region17
    $region16: #{tpu_custom_call.1} parent=1 // pred_region
      %68 = dma.done [#allocation6], 256
    $region17: #{tpu_custom_call.1} parent=1 // pred_fallthru
      _
    %69 = vsyncpa [#allocation5], 1
    %70 = vsyncpa [#allocation6], 1

</llo_original>
